<compile_context>
chip_gen: v5e
topology: v5e:2x2
jax: 0.10.0
libtpu: 0.0.40
codegen_flags: <defaults>
</compile_context>

<pallas_src>
import functools

import jax
import jax.numpy as jnp
from jax.experimental import pallas as pl
from jax.experimental.pallas import tpu as pltpu

RHS_RESIDENT_MAX_BYTES = 16 * 1024 * 1024   # keep the resident RHS to a few MiB


def _round_up(n, m):
    return ((n + m - 1) // m) * m


def _pick_tiles(n):
    """Row tile tm and reduction tile tk (both powers of two >= 128)."""
    # Reduction tile >= 256 matches the 256-deep MXU on v6e/v7x; 512 for DMA
    # efficiency on bigger graphs.
    tk = 256 if n <= 256 else 512
    # Row tile as large as possible while keeping >= 2 row tiles so both of
    # v7x's TensorCores get work under dimension_semantics=("parallel", ...).
    tm = 512
    while tm > 128 and pl.cdiv(n, tm) < 2:
        tm //= 2
    return tm, tk


def _vmem_limit_bytes(tm, tk, n_pad, c_out, rhs_resident):
    a_buf = 2 * tm * tk * 1                               # int8 A, double-buffered
    xw_rows = n_pad if rhs_resident else tk
    xw_buf = 2 * xw_rows * c_out * 2                      # bf16 RHS
    row_bufs = 3 * 2 * tm * c_out * 4                     # scale, addend, out (f32)
    acc_buf = tm * c_out * 4                              # accumulator scratch
    total = a_buf + xw_buf + row_bufs + acc_buf
    # Generous headroom for Mosaic internal scratch; stays within v7x's 64 MiB
    # (v5e/v6e have 128 MiB so this only raises their 16/32 MiB defaults).
    return int(min(56 << 20, max(2 * total, 32 << 20)))


# ---------------------------------------------------------------------------
# Propagation kernel: grid (row tiles i, reduction tiles k)
# ---------------------------------------------------------------------------
def prop_kernel(a_ref, xw_ref, scale_ref, add_ref, out_ref, acc_ref,
                *, tk, rhs_resident):
    k = pl.program_id(1)

    @pl.when(k == 0)
    def _():
        acc_ref[...] = jnp.zeros_like(acc_ref)

    # int8 {0,1,2} -> bf16 is exact; go through f32 for a robust lowering.
    a = a_ref[...].astype(jnp.float32).astype(jnp.bfloat16)

    if rhs_resident:
        off = pl.multiple_of(k * tk, tk)
        xw_k = xw_ref[pl.ds(off, tk), :]
    else:
        xw_k = xw_ref[...]

    # Single fused MXU matmul: [A @ (dis*XW_gcn) | A @ XW_nb], f32 accumulate.
    acc_ref[...] += jnp.dot(a, xw_k, preferred_element_type=jnp.float32)

    @pl.when(k == pl.num_programs(1) - 1)
    def _():
        # Row normalization + (A_hat self-loop, SAGE self term, biases) once
        # per row tile; lane-dense (tm, c_out) store.
        out_ref[...] = (acc_ref[...] * scale_ref[...]
                        + add_ref[...]).astype(out_ref.dtype)


# ---------------------------------------------------------------------------
# Wrapper
# ---------------------------------------------------------------------------
def lenski_layer(x, edge_index, params, *, tm=None, tk=None):
    """x: (N, F) float32; edge_index: (2, E) int32."""
    N, _ = x.shape
    C1 = params["w_gcn"].shape[1]
    C2 = params["w_sage_nb"].shape[1]
    c_out = C1 + C2

    if tm is None or tk is None:
        tm_d, tk_d = _pick_tiles(N)
        tm = tm if tm is not None else tm_d
        tk = tk if tk is not None else tk_d
    # tm, tk are powers of two -> lcm == max, so one padded size serves both.
    n_pad = _round_up(N, max(tm, tk))

    src = edge_index[0].astype(jnp.int32)
    dst = edge_index[1].astype(jnp.int32)

    # Raw 0/1 adjacency, int8 -- the only O(N^2) HBM stream.  Messages flow
    # src -> dst (aggregate at the destination); duplicate edges collapse to
    # weight 1 (matches the dense reference semantics).
    # TODO(synk): for large sparse graphs (N >~ 8K) replace the dense O(N^2)
    # adjacency stream with a CSR scalar-prefetch gather/segment-sum kernel.
    A = jnp.zeros((n_pad, n_pad), jnp.int8).at[dst, src].set(1)

    in_deg = jnp.sum(A, axis=1, dtype=jnp.float32)                 # (n_pad,)
    deg = in_deg + 1.0                                             # A_tilde = A + I
    d_inv_sqrt = jax.lax.rsqrt(deg)
    inv_in_deg = 1.0 / jnp.maximum(in_deg, 1.0)

    # Feature transform stays in XLA (F is tiny; <1% of runtime).
    xw_gcn = x @ params["w_gcn"]                                   # (N, C1) f32
    xw_nb = x @ params["w_sage_nb"]                                # (N, C2) f32
    xw_self = x @ params["w_sage_self"]                            # (N, C2) f32

    dis_n = d_inv_sqrt[:N, None]

    # Propagation RHS (bf16) with the source-side D^{-1/2} folded into rows:
    #   A_hat @ XW_gcn == dis * (A @ (dis * XW_gcn)) + dis^2 * XW_gcn
    xw_all = jnp.zeros((n_pad, c_out), jnp.bfloat16)
    xw_all = xw_all.at[:N, :C1].set((dis_n * xw_gcn).astype(jnp.bfloat16))
    xw_all = xw_all.at[:N, C1:].set(xw_nb.astype(jnp.bfloat16))

    # Per-row output scale (dis for the GCN half, 1/in_deg for the SAGE half).
    scale = jnp.concatenate(
        [jnp.broadcast_to(d_inv_sqrt[:, None], (n_pad, C1)),
         jnp.broadcast_to(inv_in_deg[:, None], (n_pad, C2))], axis=1)

    # f32 epilogue addend: A_hat self-loop + SAGE self term + biases.
    addend = jnp.zeros((n_pad, c_out), jnp.float32)
    addend = addend.at[:N, :C1].set(dis_n * dis_n * xw_gcn + params["b_gcn"])
    addend = addend.at[:N, C1:].set(xw_self + params["b_sage"])

    n_row = n_pad // tm
    n_k = n_pad // tk

    # Keep the propagation RHS resident in VMEM when it fits a few MiB
    # (budget x2 for the pipeline's double buffer); otherwise stream blocks.
    rhs_resident = (2 * n_pad * c_out * 2) <= RHS_RESIDENT_MAX_BYTES
    if rhs_resident:
        xw_spec = pl.BlockSpec((n_pad, c_out), lambda i, k: (0, 0))
    else:
        xw_spec = pl.BlockSpec((tk, c_out), lambda i, k: (k, 0))

    vmem_limit = _vmem_limit_bytes(tm, tk, n_pad, c_out, rhs_resident)

    out_p = pl.pallas_call(
        functools.partial(prop_kernel, tk=tk, rhs_resident=rhs_resident),
        out_shape=jax.ShapeDtypeStruct((n_pad, c_out), jnp.float32),
        grid_spec=pltpu.PrefetchScalarGridSpec(
            num_scalar_prefetch=0,
            grid=(n_row, n_k),
            in_specs=[pl.BlockSpec((tm, tk), lambda i, k: (i, k)),      # A (int8)
                      xw_spec,                                          # RHS (bf16)
                      pl.BlockSpec((tm, c_out), lambda i, k: (i, 0)),   # scale
                      pl.BlockSpec((tm, c_out), lambda i, k: (i, 0))],  # addend
            out_specs=pl.BlockSpec((tm, c_out), lambda i, k: (i, 0)),
            scratch_shapes=[pltpu.VMEM((tm, c_out), jnp.float32)],
        ),
        compiler_params=pltpu.CompilerParams(
            dimension_semantics=("parallel", "arbitrary"),
            vmem_limit_bytes=vmem_limit),
    )(A, xw_all, scale, addend)

    return out_p[:N]


def lenski_reference(x, edge_index, params):
    """Pure-JAX f32 reference (same dense-operator semantics)."""
    N = x.shape[0]
    src, dst = edge_index[0], edge_index[1]
    A = jnp.zeros((N, N), jnp.float32).at[dst, src].set(1.0)
    A_tilde = A + jnp.eye(N, dtype=jnp.float32)
    deg = A_tilde.sum(axis=1)
    d_inv_sqrt = jnp.where(deg > 0, jax.lax.rsqrt(deg), 0.0)
    A_hat = d_inv_sqrt[:, None] * A_tilde * d_inv_sqrt[None, :]
    in_deg = A.sum(axis=1)
    M = A / jnp.maximum(in_deg, 1.0)[:, None]
    gcn = A_hat @ (x @ params["w_gcn"]) + params["b_gcn"]
    sage = M @ (x @ params["w_sage_nb"]) + x @ params["w_sage_self"] + params["b_sage"]
    return jnp.concatenate([gcn, sage], axis=1)


def init_params(key, in_channels, out_channels_list):
    c1, c2 = out_channels_list
    k = jax.random.split(key, 3)
    scale = 1.0 / jnp.sqrt(jnp.float32(in_channels))
    return {
        "w_gcn": jax.random.normal(k[0], (in_channels, c1), jnp.float32) * scale,
        "b_gcn": jnp.zeros((1, c1), jnp.float32),
        "w_sage_nb": jax.random.normal(k[1], (in_channels, c2), jnp.float32) * scale,
        "w_sage_self": jax.random.normal(k[2], (in_channels, c2), jnp.float32) * scale,
        "b_sage": jnp.zeros((1, c2), jnp.float32),
    }


if __name__ == "__main__":
    key = jax.random.PRNGKey(0)

    N = 200              # nodes (padded to 256 inside the wrapper)
    F_IN = 32            # in_channels
    OUT_LIST = [64, 64]  # out_channels_list -> out_channels = 128 (lane-dense)

    kx, kp = jax.random.split(key)
    x = jax.random.normal(kx, (N, F_IN), jnp.float32)

    # Deterministic bidirectional ring graph.
    idx = jnp.arange(N, dtype=jnp.int32)
    src = jnp.concatenate([idx, (idx + 1) % N])
    dst = jnp.concatenate([(idx + 1) % N, idx])
    edge_index = jnp.stack([src, dst], axis=0)   # (2, 2N)

    params = init_params(kp, F_IN, OUT_LIST)

    out = jax.jit(lenski_layer)(x, edge_index, params)
    jax.block_until_ready(out)

    ref = lenski_reference(x, edge_index, params)
    max_err = float(jnp.max(jnp.abs(out - ref)))

    assert out.shape == (N, sum(OUT_LIST)), out.shape
    assert max_err < 0.2, f"max abs error vs f32 reference: {max_err}"
    print("KERNEL_OK")
</pallas_src>

<mosaic_0001>
module attributes {stable_mosaic.version = 11 : i64} {
  func.func @prop_kernel(%arg0: i32, %arg1: i32, %arg2: memref<128x256xi8, #tpu.memory_space<vmem>>, %arg3: memref<256x128xbf16, #tpu.memory_space<vmem>>, %arg4: memref<128x128xf32, #tpu.memory_space<vmem>>, %arg5: memref<128x128xf32, #tpu.memory_space<vmem>>, %arg6: memref<128x128xf32, #tpu.memory_space<vmem>>, %arg7: memref<128x128xf32, #tpu.memory_space<vmem>>) attributes {dimension_semantics = [#tpu.dimension_semantics<parallel>, #tpu.dimension_semantics<arbitrary>], iteration_bounds = array<i64: 2, 1>, scalar_prefetch = 0 : i64, scratch_operands = 1 : i64, tpu.core_type = #tpu.core_type<tc>, window_params = [{transform_indices = @transform_0, window_bounds = array<i64: 128, 256>}, {pipeline_mode = #tpu.pipeline_mode<synchronous>, transform_indices = @transform_1, window_bounds = array<i64: 256, 128>}, {transform_indices = @transform_2, window_bounds = array<i64: 128, 128>}, {transform_indices = @transform_3, window_bounds = array<i64: 128, 128>}, {transform_indices = @transform_4, window_bounds = array<i64: 128, 128>}]} {
    %c0_i32 = arith.constant 0 : i32
    %0 = arith.cmpi eq, %arg1, %c0_i32 : i32
    %1 = arith.extui %0 : i1 to i32
    %c0_i32_0 = arith.constant 0 : i32
    %2 = arith.cmpi ne, %1, %c0_i32_0 : i32
    scf.if %2 {
      %cst_9 = arith.constant 0.000000e+00 : f32
      %17 = vector.broadcast %cst_9 : f32 to vector<128x128xf32>
      %c0_10 = arith.constant 0 : index
      %c0_11 = arith.constant 0 : index
      %18 = vector.load %arg7[%c0_10, %c0_11] : memref<128x128xf32, #tpu.memory_space<vmem>>, vector<128x128xf32>
      tpu.vector_store %arg7[%c0_10, %c0_11], %17 {strides = array<i32>} : memref<128x128xf32, #tpu.memory_space<vmem>>, vector<128x128xf32>,
    } else {
    }
    %c0 = arith.constant 0 : index
    %c0_1 = arith.constant 0 : index
    %3 = vector.load %arg2[%c0, %c0_1] : memref<128x256xi8, #tpu.memory_space<vmem>>, vector<128x256xi8>
    %4 = arith.sitofp %3 : vector<128x256xi8> to vector<128x256xf32>
    %5 = arith.truncf %4 : vector<128x256xf32> to vector<128x256xbf16>
    %c256_i32 = arith.constant 256 : i32
    %6 = arith.muli %arg1, %c256_i32 : i32
    %7 = tpu.assume_multiple %6, 256 : i32
    %8 = arith.index_cast %7 : i32 to index
    %c0_2 = arith.constant 0 : index
    %9 = vector.load %arg3[%8, %c0_2] : memref<256x128xbf16, #tpu.memory_space<vmem>>, vector<256x128xbf16>
    %c0_3 = arith.constant 0 : index
    %c0_4 = arith.constant 0 : index
    %10 = vector.load %arg7[%c0_3, %c0_4] : memref<128x128xf32, #tpu.memory_space<vmem>>, vector<128x128xf32>
    %cst = arith.constant dense<0.000000e+00> : vector<128x128xf32>
    %11 = tpu.matmul %5, %9, %cst {dimension_numbers = #tpu.dot_dimension_numbers<[1], [0], [0], [1], [0, 0, 1, 1], [], []>} : vector<128x256xbf16>, vector<256x128xbf16>, vector<128x128xf32> -> vector<128x128xf32>
    %12 = arith.addf %10, %11 : vector<128x128xf32>
    %c0_5 = arith.constant 0 : index
    %c0_6 = arith.constant 0 : index
    %13 = vector.load %arg7[%c0_5, %c0_6] : memref<128x128xf32, #tpu.memory_space<vmem>>, vector<128x128xf32>
    tpu.vector_store %arg7[%c0_5, %c0_6], %12 {strides = array<i32>} : memref<128x128xf32, #tpu.memory_space<vmem>>, vector<128x128xf32>,
    %c0_i32_7 = arith.constant 0 : i32
    %14 = arith.cmpi eq, %arg1, %c0_i32_7 : i32
    %15 = arith.extui %14 : i1 to i32
    %c0_i32_8 = arith.constant 0 : i32
    %16 = arith.cmpi ne, %15, %c0_i32_8 : i32
    scf.if %16 {
      %c0_9 = arith.constant 0 : index
      %c0_10 = arith.constant 0 : index
      %17 = vector.load %arg7[%c0_9, %c0_10] : memref<128x128xf32, #tpu.memory_space<vmem>>, vector<128x128xf32>
      %c0_11 = arith.constant 0 : index
      %c0_12 = arith.constant 0 : index
      %18 = vector.load %arg4[%c0_11, %c0_12] : memref<128x128xf32, #tpu.memory_space<vmem>>, vector<128x128xf32>
      %19 = arith.mulf %17, %18 : vector<128x128xf32>
      %c0_13 = arith.constant 0 : index
      %c0_14 = arith.constant 0 : index
      %20 = vector.load %arg5[%c0_13, %c0_14] : memref<128x128xf32, #tpu.memory_space<vmem>>, vector<128x128xf32>
      %21 = arith.addf %19, %20 : vector<128x128xf32>
      %c0_15 = arith.constant 0 : index
      %c0_16 = arith.constant 0 : index
      %22 = vector.load %arg6[%c0_15, %c0_16] : memref<128x128xf32, #tpu.memory_space<vmem>>, vector<128x128xf32>
      tpu.vector_store %arg6[%c0_15, %c0_16], %21 {strides = array<i32>} : memref<128x128xf32, #tpu.memory_space<vmem>>, vector<128x128xf32>,
    } else {
    }
    return
  }
  func.func @transform_0(%arg0: i32, %arg1: i32) -> (i32, i32) {
    %c0_i32 = arith.constant 0 : i32
    return %arg0, %arg1 : i32, i32
  }
  func.func @transform_1(%arg0: i32, %arg1: i32) -> (i32, i32) {
    %c0_i32 = arith.constant 0 : i32
    %c0_i32_0 = arith.constant 0 : i32
    %c0_i32_1 = arith.constant 0 : i32
    return %c0_i32, %c0_i32_0 : i32, i32
  }
  func.func @transform_2(%arg0: i32, %arg1: i32) -> (i32, i32) {
    %c0_i32 = arith.constant 0 : i32
    %c0_i32_0 = arith.constant 0 : i32
    return %arg0, %c0_i32 : i32, i32
  }
  func.func @transform_3(%arg0: i32, %arg1: i32) -> (i32, i32) {
    %c0_i32 = arith.constant 0 : i32
    %c0_i32_0 = arith.constant 0 : i32
    return %arg0, %c0_i32 : i32, i32
  }
  func.func @transform_4(%arg0: i32, %arg1: i32) -> (i32, i32) {
    %c0_i32 = arith.constant 0 : i32
    %c0_i32_0 = arith.constant 0 : i32
    return %arg0, %c0_i32 : i32, i32
  }
}

</mosaic_0001>

<llo_original>
// kernel: lenski_layer.1
$region0: #{lenski_layer.1}
  #allocation0 [shape = 'u32[]', space=smem, size = 0x4, offset = 0x4, fixed_abs, tag = 'smem constant byte address 0x4 - core index']
  #allocation1 [shape = 'u32[72,128]{1,0:T(1,128)}', space=vmem, size = 0x9000, scoped, tag = 'internal scratch']
  #allocation2 [shape = 'f32[128,128]{1,0:T(8,128)}', space=vmem, size = 0x10000, scoped, tag = 'scratch operand']
  %s0 = inlined_call_operand.vmem [shape: s8[256,256], index: 0, kind: input, shape index: {}]
  %s1 = inlined_call_operand.vmem [shape: bf16[256,128], index: 1, kind: input, shape index: {}]
  %s2 = inlined_call_operand.vmem [shape: f32[256,128], index: 2, kind: input, shape index: {}]
  %s3 = inlined_call_operand.vmem [shape: f32[256,128], index: 3, kind: input, shape index: {}]
  %s4 = inlined_call_operand.vmem [shape: f32[256,128], index: 4, kind: output, shape index: {}]
  %s5 = sld [smem:[#allocation0]]
  $region57: #{lenski_layer.1} parent=0
    _
  %s7 = ssub.s32 1, %s5
  %s8 = scalar_select 0, %s7, %s5
  loop: start=0, step=1, limit=4
  $region2: #{lenski_layer.1} parent=0 // loop_pre_header
    _
  $region3: #{lenski_layer.1} parent=0 // loop_header
    %s10 = sphi 0, %s14
    %p11 = scmp.ge.s32.totalorder %s10, 4
    %s17 = sphi 0, %s29
    %s18 = sphi 0, %s25
    %s19 = sphi 0, %s17
    %s20 = sphi 0, %s18
    %s21 = sphi 0, %s19
    %s22 = sphi 0, %s20
    %s34 = sphi 0, %s36
    %s37 = sphi 0, %s34
    %s38 = sphi 0, %s37
    %s54 = sphi 0, %s38
    %s58 = sphi 0, %s58
    %s60 = sphi 0, %s58
    %s61 = sphi 0, %s60
    %s75 = sphi 0, %s61
    %s81 = sphi 0, %s83
    %s84 = sphi 0, %s81
    %s85 = sphi 0, %s84
    %s101 = sphi 0, %s85
    %s107 = sphi 0, %s109
    %s110 = sphi 0, %s107
    %s111 = sphi 0, %s110
    %s127 = sphi 0, %s111
    %s133 = sphi 0, %s135
    %s136 = sphi 0, %s133
    %s137 = sphi 0, %s136
    %s153 = sphi 0, %s137
  $region4: #{lenski_layer.1} parent=0 // loop_header_branch
    %13 = sbr.rel (%p11) target = $region8
  $region5: #{lenski_layer.1} parent=0 // loop_body
    %s15 = ssub.s32 %s10, 1
    %s16 = ssub.s32 %s10, 2
    %s23 = sadd.s32 1, %s18
    %p24 = scmp.ge.s32.totalorder %s23, 1
    %s25 = scalar_select %p24, 0, %s23
    %s26 = sadd.s32 1, %s17
    %s27 = scalar_select %p24, %s26, %s17
    %p28 = scmp.ge.s32.totalorder %s27, 2
    %s29 = scalar_select %p28, 0, %s27
    %s30 = ssub.s32 %s17, %s29
    %s31 = ssub.s32 %s18, %s25
    %s32 = sor.u32 %s30, %s31
    %p33 = scmp.eq.s32.totalorder %s32, 0
    %s35 = sadd.s32 %s34, 1
    %s36 = scalar_select %p33, %s34, %s35
    %p39 = pneg %p33
    %p40 = scmp.eq.s32.totalorder %s10, 1
    %p41 = por %p39, %p40
    %p42 = scmp.ne.s32.totalorder %s34, %s37
    %p43 = scmp.eq.s32.totalorder %s10, 0
    %p44 = por %p42, %p43
    %p45 = scmp.ne.s32.totalorder %s34, %s37
    %p46 = scmp.eq.s32.totalorder %s15, 1
    %p47 = por %p45, %p46
    %p48 = scmp.ne.s32.totalorder %s37, %s38
    %p49 = scmp.eq.s32.totalorder %s15, 0
    %p50 = por %p48, %p49
    %p51 = scmp.ne.s32.totalorder %s37, %s38
    %p52 = scmp.eq.s32.totalorder %s16, 1
    %p53 = por %p51, %p52
    %p55 = scmp.ne.s32.totalorder %s38, %s54
    %p56 = scmp.eq.s32.totalorder %s16, 0
    %p57 = por %p55, %p56
    %s59 = sadd.s32 %s58, 1
    %p62 = scmp.eq.s32.totalorder %s10, 1
    %p63 = scmp.ne.s32.totalorder %s58, %s60
    %p64 = scmp.eq.s32.totalorder %s10, 0
    %p65 = por %p63, %p64
    %p66 = scmp.ne.s32.totalorder %s58, %s60
    %p67 = scmp.eq.s32.totalorder %s15, 1
    %p68 = por %p66, %p67
    %p69 = scmp.ne.s32.totalorder %s60, %s61
    %p70 = scmp.eq.s32.totalorder %s15, 0
    %p71 = por %p69, %p70
    %p72 = scmp.ne.s32.totalorder %s60, %s61
    %p73 = scmp.eq.s32.totalorder %s16, 1
    %p74 = por %p72, %p73
    %p76 = scmp.ne.s32.totalorder %s61, %s75
    %p77 = scmp.eq.s32.totalorder %s16, 0
    %p78 = por %p76, %p77
    %s79 = ssub.s32 %s17, %s29
    %p80 = scmp.eq.s32.totalorder %s79, 0
    %s82 = sadd.s32 %s81, 1
    %s83 = scalar_select %p80, %s81, %s82
    %p86 = pneg %p80
    %p87 = scmp.eq.s32.totalorder %s10, 1
    %p88 = por %p86, %p87
    %p89 = scmp.ne.s32.totalorder %s81, %s84
    %p90 = scmp.eq.s32.totalorder %s10, 0
    %p91 = por %p89, %p90
    %p92 = scmp.ne.s32.totalorder %s81, %s84
    %p93 = scmp.eq.s32.totalorder %s15, 1
    %p94 = por %p92, %p93
    %p95 = scmp.ne.s32.totalorder %s84, %s85
    %p96 = scmp.eq.s32.totalorder %s15, 0
    %p97 = por %p95, %p96
    %p98 = scmp.ne.s32.totalorder %s84, %s85
    %p99 = scmp.eq.s32.totalorder %s16, 1
    %p100 = por %p98, %p99
    %p102 = scmp.ne.s32.totalorder %s85, %s101
    %p103 = scmp.eq.s32.totalorder %s16, 0
    %p104 = por %p102, %p103
    %s105 = ssub.s32 %s17, %s29
    %p106 = scmp.eq.s32.totalorder %s105, 0
    %s108 = sadd.s32 %s107, 1
    %s109 = scalar_select %p106, %s107, %s108
    %p112 = pneg %p106
    %p113 = scmp.eq.s32.totalorder %s10, 1
    %p114 = por %p112, %p113
    %p115 = scmp.ne.s32.totalorder %s107, %s110
    %p116 = scmp.eq.s32.totalorder %s10, 0
    %p117 = por %p115, %p116
    %p118 = scmp.ne.s32.totalorder %s107, %s110
    %p119 = scmp.eq.s32.totalorder %s15, 1
    %p120 = por %p118, %p119
    %p121 = scmp.ne.s32.totalorder %s110, %s111
    %p122 = scmp.eq.s32.totalorder %s15, 0
    %p123 = por %p121, %p122
    %p124 = scmp.ne.s32.totalorder %s110, %s111
    %p125 = scmp.eq.s32.totalorder %s16, 1
    %p126 = por %p124, %p125
    %p128 = scmp.ne.s32.totalorder %s111, %s127
    %p129 = scmp.eq.s32.totalorder %s16, 0
    %p130 = por %p128, %p129
    %s131 = ssub.s32 %s17, %s29
    %p132 = scmp.eq.s32.totalorder %s131, 0
    %s134 = sadd.s32 %s133, 1
    %s135 = scalar_select %p132, %s133, %s134
    %p138 = pneg %p132
    %p139 = scmp.eq.s32.totalorder %s10, 1
    %p140 = por %p138, %p139
    %p141 = scmp.ne.s32.totalorder %s133, %s136
    %p142 = scmp.eq.s32.totalorder %s10, 0
    %p143 = por %p141, %p142
    %p144 = scmp.ne.s32.totalorder %s133, %s136
    %p145 = scmp.eq.s32.totalorder %s15, 1
    %p146 = por %p144, %p145
    %p147 = scmp.ne.s32.totalorder %s136, %s137
    %p148 = scmp.eq.s32.totalorder %s15, 0
    %p149 = por %p147, %p148
    %p150 = scmp.ne.s32.totalorder %s136, %s137
    %p151 = scmp.eq.s32.totalorder %s16, 1
    %p152 = por %p150, %p151
    %p154 = scmp.ne.s32.totalorder %s137, %s153
    %p155 = scmp.eq.s32.totalorder %s16, 0
    %p156 = por %p154, %p155
    %p157 = scmp.le.s32.totalorder 1, %s10
    %p158 = scmp.lt.s32.totalorder %s10, 3
    %p159 = pnand %p157, %p158
    %p160 = pneg %p159
    // Predicated region
    $region9: #{lenski_layer.1} parent=5 // pred_check
      _
    $region10: #{lenski_layer.1} parent=5 // pred_check_branch
      %162 = sbr.rel (%p159) target = $region12
    $region11: #{lenski_layer.1} parent=5 // pred_region
      %s163 = ssub.s32 %s10, 1
      // Predicated region
      $region13: #{lenski_layer.1} parent=11 // pred_check
        %p164 = pneg %p71
      $region14: #{lenski_layer.1} parent=11 // pred_check_branch
        %166 = sbr.rel (%p164) target = $region16
      $region15: #{lenski_layer.1} parent=11 // pred_region
        _
      $region16: #{lenski_layer.1} parent=11 // pred_fallthru
        _
    $region12: #{lenski_layer.1} parent=5 // pred_fallthru
      _
    %p167 = scmp.lt.s32.totalorder %s10, 2
    // Predicated region
    $region17: #{lenski_layer.1} parent=5 // pred_check
      %p168 = pneg %p167
    $region18: #{lenski_layer.1} parent=5 // pred_check_branch
      %170 = sbr.rel (%p168) target = $region20
    $region19: #{lenski_layer.1} parent=5 // pred_region
      // Predicated region
      $region21: #{lenski_layer.1} parent=19 // pred_check
        %p171 = pneg %p44
      $region22: #{lenski_layer.1} parent=19 // pred_check_branch
        %173 = sbr.rel (%p171) target = $region24
      $region23: #{lenski_layer.1} parent=19 // pred_region
        %s174 = smul.u32 16, %s17
        %s175 = smul.u32 2, %s18
        %p176 = scmp.lt.s32.totalorder %s174, 31
        %s177 = scalar_select %p176, %s174, 31
        %p178 = scmp.lt.s32.totalorder %s175, 1
        %s179 = scalar_select %p178, %s175, 1
        %s180 = smul.addr %s177, 2
        %s181 = sadd.s32 %s179, %s180
        %s182 = smul.addr %s181, 2
        %s183 = scalar_lea.vmem %s0, %s182
        %s184 = smul.u32 16, %s17
        %s185 = smul.u32 2, %s18
      $region24: #{lenski_layer.1} parent=19 // pred_fallthru
        _
      // Predicated region
      $region25: #{lenski_layer.1} parent=19 // pred_check
        %p186 = pneg %p91
      $region26: #{lenski_layer.1} parent=19 // pred_check_branch
        %188 = sbr.rel (%p186) target = $region28
      $region27: #{lenski_layer.1} parent=19 // pred_region
        %s189 = smul.u32 16, %s17
        %p190 = scmp.lt.s32.totalorder %s189, 31
        %s191 = scalar_select %p190, %s189, 31
        %s192 = smul.addr %s191, 8
        %s193 = scalar_lea.vmem %s2, %s192
        %s194 = smul.u32 16, %s17
      $region28: #{lenski_layer.1} parent=19 // pred_fallthru
        _
      // Predicated region
      $region29: #{lenski_layer.1} parent=19 // pred_check
        %p195 = pneg %p117
      $region30: #{lenski_layer.1} parent=19 // pred_check_branch
        %197 = sbr.rel (%p195) target = $region32
      $region31: #{lenski_layer.1} parent=19 // pred_region
        %s198 = smul.u32 16, %s17
        %p199 = scmp.lt.s32.totalorder %s198, 31
        %s200 = scalar_select %p199, %s198, 31
        %s201 = smul.addr %s200, 8
        %s202 = scalar_lea.vmem %s3, %s201
        %s203 = smul.u32 16, %s17
      $region32: #{lenski_layer.1} parent=19 // pred_fallthru
        _
    $region20: #{lenski_layer.1} parent=5 // pred_fallthru
      _
    %p204 = scmp.le.s32.totalorder 1, %s10
    %p205 = scmp.lt.s32.totalorder %s10, 3
    %p206 = pnand %p204, %p205
    %p207 = pneg %p206
    // Predicated region
    $region33: #{lenski_layer.1} parent=5 // pred_check
      _
    $region34: #{lenski_layer.1} parent=5 // pred_check_branch
      %209 = sbr.rel (%p206) target = $region36
    $region35: #{lenski_layer.1} parent=5 // pred_region
      %s210 = ssub.s32 %s10, 1
      %s211 = smul.u32 16, %s19
      %s212 = smul.u32 2, %s20
      %p213 = scmp.lt.s32.totalorder %s211, 31
      %s214 = scalar_select %p213, %s211, 31
      %p215 = scmp.lt.s32.totalorder %s212, 1
      %s216 = scalar_select %p215, %s212, 1
      %s217 = smul.addr %s214, 2
      %s218 = sadd.s32 %s216, %s217
      %s219 = smul.addr %s218, 2
      %s220 = scalar_lea.vmem %s0, %s219
      %p221 = pneg %p50
      %p222 = pneg %p47
      %p223 = pneg %p71
      %p224 = pneg %p68
      %s225 = smul.u32 16, %s19
      %p226 = scmp.lt.s32.totalorder %s225, 31
      %s227 = scalar_select %p226, %s225, 31
      %s228 = smul.addr %s227, 8
      %s229 = scalar_lea.vmem %s2, %s228
      %p230 = pneg %p97
      %p231 = pneg %p94
      %s232 = smul.u32 16, %s19
      %p233 = scmp.lt.s32.totalorder %s232, 31
      %s234 = scalar_select %p233, %s232, 31
      %s235 = smul.addr %s234, 8
      %s236 = scalar_lea.vmem %s3, %s235
      %p237 = pneg %p123
      %p238 = pneg %p120
      %p239 = pneg %p149
      %p240 = pneg %p146
      %s241 = smul.u32 16, %s19
      %p242 = scmp.lt.s32.totalorder %s241, 31
      %s243 = scalar_select %p242, %s241, 31
      %s244 = smul.addr %s243, 8
      %s245 = scalar_lea.vmem %s4, %s244
      %s246 = smul.u32 16, %s19
      %s247 = smul.u32 2, %s20
      %p248 = scmp.lt.s32.totalorder %s246, 31
      %s249 = scalar_select %p248, %s246, 31
      %p250 = scmp.lt.s32.totalorder %s247, 1
      %s251 = scalar_select %p250, %s247, 1
      %s252 = smul.addr %s249, 2
      %s253 = sadd.s32 %s251, %s252
      %s254 = smul.addr %s253, 2
      %s255 = scalar_lea.vmem %s0, %s254
      %s256 = smul.u32 16, %s19
      %s257 = smul.u32 2, %s20
      %s258 = smul.u32 16, %s19
      %p259 = scmp.lt.s32.totalorder %s258, 31
      %s260 = scalar_select %p259, %s258, 31
      %s261 = smul.addr %s260, 8
      %s262 = scalar_lea.vmem %s2, %s261
      %s263 = smul.u32 16, %s19
      %s264 = smul.u32 16, %s19
      %p265 = scmp.lt.s32.totalorder %s264, 31
      %s266 = scalar_select %p265, %s264, 31
      %s267 = smul.addr %s266, 8
      %s268 = scalar_lea.vmem %s3, %s267
      %s269 = smul.u32 16, %s19
      %s270 = smul.u32 16, %s19
      %p271 = scmp.lt.s32.totalorder %s270, 31
      %s272 = scalar_select %p271, %s270, 31
      %s273 = smul.addr %s272, 8
      %s274 = scalar_lea.vmem %s4, %s273
      %s275 = smul.u32 16, %s19
      %p276 = scmp.eq.s32.totalorder %s20, 0
      // Predicated region
      $region37: #{lenski_layer.1} parent=35 // pred_check
        %p277 = pneg %p276
      $region38: #{lenski_layer.1} parent=35 // pred_check_branch
        %279 = sbr.rel (%p277) target = $region40
      $region39: #{lenski_layer.1} parent=35 // pred_region
        %280 = vst [vmem:[#allocation2] sm:$0xff] 0.0
        %281 = vst [vmem:[#allocation2 + $0x8] sm:$0xff] 0.0
        %282 = vst [vmem:[#allocation2 + $0x10] sm:$0xff] 0.0
        %283 = vst [vmem:[#allocation2 + $0x18] sm:$0xff] 0.0
        %284 = vst [vmem:[#allocation2 + $0x20] sm:$0xff] 0.0
        %285 = vst [vmem:[#allocation2 + $0x28] sm:$0xff] 0.0
        %286 = vst [vmem:[#allocation2 + $0x30] sm:$0xff] 0.0
        %287 = vst [vmem:[#allocation2 + $0x38] sm:$0xff] 0.0
        %288 = vst [vmem:[#allocation2 + $0x40] sm:$0xff] 0.0
        %289 = vst [vmem:[#allocation2 + $0x48] sm:$0xff] 0.0
        %290 = vst [vmem:[#allocation2 + $0x50] sm:$0xff] 0.0
        %291 = vst [vmem:[#allocation2 + $0x58] sm:$0xff] 0.0
        %292 = vst [vmem:[#allocation2 + $0x60] sm:$0xff] 0.0
        %293 = vst [vmem:[#allocation2 + $0x68] sm:$0xff] 0.0
        %294 = vst [vmem:[#allocation2 + $0x70] sm:$0xff] 0.0
        %295 = vst [vmem:[#allocation2 + $0x78] sm:$0xff] 0.0
      $region40: #{lenski_layer.1} parent=35 // pred_fallthru
        _
      %v296 = vld [vmem:[%s255] sm:$0xf]
      %v297 = vld [vmem:[%s255 + $0x4] sm:$0xf]
      %v298 = vld [vmem:[%s255 + $0x8] sm:$0xf]
      %v299 = vld [vmem:[%s255 + $0xc] sm:$0xf]
      %v300 = vld [vmem:[%s255 + $0x10] sm:$0xf]
      %v301 = vld [vmem:[%s255 + $0x14] sm:$0xf]
      %v302 = vld [vmem:[%s255 + $0x18] sm:$0xf]
      %v303 = vld [vmem:[%s255 + $0x1c] sm:$0xf]
      %v304 = vld [vmem:[%s255 + $0x20] sm:$0xf]
      %v305 = vld [vmem:[%s255 + $0x24] sm:$0xf]
      %v306 = vld [vmem:[%s255 + $0x28] sm:$0xf]
      %v307 = vld [vmem:[%s255 + $0x2c] sm:$0xf]
      %v308 = vld [vmem:[%s255 + $0x30] sm:$0xf]
      %v309 = vld [vmem:[%s255 + $0x34] sm:$0xf]
      %v310 = vld [vmem:[%s255 + $0x38] sm:$0xf]
      %v311 = vld [vmem:[%s255 + $0x3c] sm:$0xf]
      %v312 = vunpack.c.0.s8 %v296
      %v313 = vunpack.c.1.s8 %v296
      %v314 = vunpack.c.0.s8 %v297
      %v315 = vunpack.c.1.s8 %v297
      %v316 = vunpack.c.0.s8 %v298
      %v317 = vunpack.c.1.s8 %v298
      %v318 = vunpack.c.0.s8 %v299
      %v319 = vunpack.c.1.s8 %v299
      %v320 = vunpack.c.0.s8 %v300
      %v321 = vunpack.c.1.s8 %v300
      %v322 = vunpack.c.0.s8 %v301
      %v323 = vunpack.c.1.s8 %v301
      %v324 = vunpack.c.0.s8 %v302
      %v325 = vunpack.c.1.s8 %v302
      %v326 = vunpack.c.0.s8 %v303
      %v327 = vunpack.c.1.s8 %v303
      %v328 = vunpack.c.0.s8 %v304
      %v329 = vunpack.c.1.s8 %v304
      %v330 = vunpack.c.0.s8 %v305
      %v331 = vunpack.c.1.s8 %v305
      %v332 = vunpack.c.0.s8 %v306
      %v333 = vunpack.c.1.s8 %v306
      %v334 = vunpack.c.0.s8 %v307
      %v335 = vunpack.c.1.s8 %v307
      %v336 = vunpack.c.0.s8 %v308
      %v337 = vunpack.c.1.s8 %v308
      %v338 = vunpack.c.0.s8 %v309
      %v339 = vunpack.c.1.s8 %v309
      %v340 = vunpack.c.0.s8 %v310
      %v341 = vunpack.c.1.s8 %v310
      %v342 = vunpack.c.0.s8 %v311
      %v343 = vunpack.c.1.s8 %v311
      %v344 = vcvt.s32.f32 %v312
      %v345 = vcvt.s32.f32 %v313
      %v346 = vcvt.s32.f32 %v314
      %v347 = vcvt.s32.f32 %v315
      %v348 = vcvt.s32.f32 %v316
      %v349 = vcvt.s32.f32 %v317
      %v350 = vcvt.s32.f32 %v318
      %v351 = vcvt.s32.f32 %v319
      %v352 = vcvt.s32.f32 %v320
      %v353 = vcvt.s32.f32 %v321
      %v354 = vcvt.s32.f32 %v322
      %v355 = vcvt.s32.f32 %v323
      %v356 = vcvt.s32.f32 %v324
      %v357 = vcvt.s32.f32 %v325
      %v358 = vcvt.s32.f32 %v326
      %v359 = vcvt.s32.f32 %v327
      %v360 = vcvt.s32.f32 %v328
      %v361 = vcvt.s32.f32 %v329
      %v362 = vcvt.s32.f32 %v330
      %v363 = vcvt.s32.f32 %v331
      %v364 = vcvt.s32.f32 %v332
      %v365 = vcvt.s32.f32 %v333
      %v366 = vcvt.s32.f32 %v334
      %v367 = vcvt.s32.f32 %v335
      %v368 = vcvt.s32.f32 %v336
      %v369 = vcvt.s32.f32 %v337
      %v370 = vcvt.s32.f32 %v338
      %v371 = vcvt.s32.f32 %v339
      %v372 = vcvt.s32.f32 %v340
      %v373 = vcvt.s32.f32 %v341
      %v374 = vcvt.s32.f32 %v342
      %v375 = vcvt.s32.f32 %v343
      %v376 = vpack.c.bf16 %v346, %v344
      %v377 = vpack.c.bf16 %v347, %v345
      %v378 = vpack.c.bf16 %v350, %v348
      %v379 = vpack.c.bf16 %v351, %v349
      %v380 = vpack.c.bf16 %v354, %v352
      %v381 = vpack.c.bf16 %v355, %v353
      %v382 = vpack.c.bf16 %v358, %v356
      %v383 = vpack.c.bf16 %v359, %v357
      %v384 = vpack.c.bf16 %v362, %v360
      %v385 = vpack.c.bf16 %v363, %v361
      %v386 = vpack.c.bf16 %v366, %v364
      %v387 = vpack.c.bf16 %v367, %v365
      %v388 = vpack.c.bf16 %v370, %v368
      %v389 = vpack.c.bf16 %v371, %v369
      %v390 = vpack.c.bf16 %v374, %v372
      %v391 = vpack.c.bf16 %v375, %v373
      %s392 = smul.u32 %s20, 256
      %s393 = sshra.s32 %s392, 3
      %s394 = sand.u32 %s392, 7
      %s395 = smul.addr %s393, 4
      %s396 = scalar_lea.vmem %s1, %s395
      %v397 = vld [vmem:[%s396] sm:$0xf]
      %v398 = vld [vmem:[%s396 + $0x4] sm:$0xf]
      %v399 = vld [vmem:[%s396 + $0x8] sm:$0xf]
      %v400 = vld [vmem:[%s396 + $0xc] sm:$0xf]
      %v401 = vld [vmem:[%s396 + $0x10] sm:$0xf]
      %v402 = vld [vmem:[%s396 + $0x14] sm:$0xf]
      %v403 = vld [vmem:[%s396 + $0x18] sm:$0xf]
      %v404 = vld [vmem:[%s396 + $0x1c] sm:$0xf]
      %v405 = vld [vmem:[%s396 + $0x20] sm:$0xf]
      %v406 = vld [vmem:[%s396 + $0x24] sm:$0xf]
      %v407 = vld [vmem:[%s396 + $0x28] sm:$0xf]
      %v408 = vld [vmem:[%s396 + $0x2c] sm:$0xf]
      %v409 = vld [vmem:[%s396 + $0x30] sm:$0xf]
      %v410 = vld [vmem:[%s396 + $0x34] sm:$0xf]
      %v411 = vld [vmem:[%s396 + $0x38] sm:$0xf]
      %v412 = vld [vmem:[%s396 + $0x3c] sm:$0xf]
      %v413 = vld [vmem:[%s396 + $0x40] sm:$0xf]
      %v414 = vld [vmem:[%s396 + $0x44] sm:$0xf]
      %v415 = vld [vmem:[%s396 + $0x48] sm:$0xf]
      %v416 = vld [vmem:[%s396 + $0x4c] sm:$0xf]
      %v417 = vld [vmem:[%s396 + $0x50] sm:$0xf]
      %v418 = vld [vmem:[%s396 + $0x54] sm:$0xf]
      %v419 = vld [vmem:[%s396 + $0x58] sm:$0xf]
      %v420 = vld [vmem:[%s396 + $0x5c] sm:$0xf]
      %v421 = vld [vmem:[%s396 + $0x60] sm:$0xf]
      %v422 = vld [vmem:[%s396 + $0x64] sm:$0xf]
      %v423 = vld [vmem:[%s396 + $0x68] sm:$0xf]
      %v424 = vld [vmem:[%s396 + $0x6c] sm:$0xf]
      %v425 = vld [vmem:[%s396 + $0x70] sm:$0xf]
      %v426 = vld [vmem:[%s396 + $0x74] sm:$0xf]
      %v427 = vld [vmem:[%s396 + $0x78] sm:$0xf]
      %v428 = vld [vmem:[%s396 + $0x7c] sm:$0xf]
      %v429 = vld [vmem:[#allocation2] sm:$0xff]
      %v430 = vld [vmem:[#allocation2 + $0x8] sm:$0xff]
      %v431 = vld [vmem:[#allocation2 + $0x10] sm:$0xff]
      %v432 = vld [vmem:[#allocation2 + $0x18] sm:$0xff]
      %v433 = vld [vmem:[#allocation2 + $0x20] sm:$0xff]
      %v434 = vld [vmem:[#allocation2 + $0x28] sm:$0xff]
      %v435 = vld [vmem:[#allocation2 + $0x30] sm:$0xff]
      %v436 = vld [vmem:[#allocation2 + $0x38] sm:$0xff]
      %v437 = vld [vmem:[#allocation2 + $0x40] sm:$0xff]
      %v438 = vld [vmem:[#allocation2 + $0x48] sm:$0xff]
      %v439 = vld [vmem:[#allocation2 + $0x50] sm:$0xff]
      %v440 = vld [vmem:[#allocation2 + $0x58] sm:$0xff]
      %v441 = vld [vmem:[#allocation2 + $0x60] sm:$0xff]
      %v442 = vld [vmem:[#allocation2 + $0x68] sm:$0xff]
      %v443 = vld [vmem:[#allocation2 + $0x70] sm:$0xff]
      %v444 = vld [vmem:[#allocation2 + $0x78] sm:$0xff]
      %v477 = vunpack.c.l.b16 %v397
      %v478 = vunpack.c.l.b16 %v398
      %v479 = vunpack.c.l.b16 %v399
      %v480 = vunpack.c.l.b16 %v400
      %v481 = vunpack.c.l.b16 %v401
      %v482 = vunpack.c.l.b16 %v402
      %v483 = vunpack.c.l.b16 %v403
      %v484 = vunpack.c.l.b16 %v404
      %v485 = vunpack.c.l.b16 %v405
      %v486 = vunpack.c.l.b16 %v406
      %v487 = vunpack.c.l.b16 %v407
      %v488 = vunpack.c.l.b16 %v408
      %v489 = vunpack.c.l.b16 %v409
      %v490 = vunpack.c.l.b16 %v410
      %v491 = vunpack.c.l.b16 %v411
      %v492 = vunpack.c.l.b16 %v412
      %v493 = vunpack.c.l.b16 %v413
      %v494 = vunpack.c.l.b16 %v414
      %v495 = vunpack.c.l.b16 %v415
      %v496 = vunpack.c.l.b16 %v416
      %v497 = vunpack.c.l.b16 %v417
      %v498 = vunpack.c.l.b16 %v418
      %v499 = vunpack.c.l.b16 %v419
      %v500 = vunpack.c.l.b16 %v420
      %v501 = vunpack.c.l.b16 %v421
      %v502 = vunpack.c.l.b16 %v422
      %v503 = vunpack.c.l.b16 %v423
      %v504 = vunpack.c.l.b16 %v424
      %v505 = vunpack.c.l.b16 %v425
      %v506 = vunpack.c.l.b16 %v426
      %v507 = vunpack.c.l.b16 %v427
      %v508 = vunpack.c.l.b16 %v428
      %v509 = vpack.c.b16 %v478, %v477
      %v510 = vpack.c.b16 %v480, %v479
      %v511 = vpack.c.b16 %v482, %v481
      %v512 = vpack.c.b16 %v484, %v483
      %v513 = vpack.c.b16 %v486, %v485
      %v514 = vpack.c.b16 %v488, %v487
      %v515 = vpack.c.b16 %v490, %v489
      %v516 = vpack.c.b16 %v492, %v491
      %v517 = vpack.c.b16 %v494, %v493
      %v518 = vpack.c.b16 %v496, %v495
      %v519 = vpack.c.b16 %v498, %v497
      %v520 = vpack.c.b16 %v500, %v499
      %v521 = vpack.c.b16 %v502, %v501
      %v522 = vpack.c.b16 %v504, %v503
      %v523 = vpack.c.b16 %v506, %v505
      %v524 = vpack.c.b16 %v508, %v507
      %541 = vmatpush.bf16.msra.mxu0 %v516
      %542 = vmatpush.bf16.msra.mxu0 %v515
      %543 = vmatpush.bf16.msra.mxu0 %v514
      %544 = vmatpush.bf16.msra.mxu0 %v513
      %545 = vmatpush.bf16.msra.mxu0 %v512
      %546 = vmatpush.bf16.msra.mxu0 %v511
      %547 = vmatpush.bf16.msra.mxu0 %v510
      %548 = vmatpush.bf16.msra.mxu0 %v509
      %549 = vmatmul.bf16.gmra.mxu0 %v376
      %v550 = vpop.f32.mrf.mxu0
      %v551 = vadd.f32 0.0, %v550
      %v552 = vpop.f32.mrf.mxu0
      %v553 = vadd.f32 0.0, %v552
      %554 = vmatmul.bf16.gmra.mxu0 %v378
      %v555 = vpop.f32.mrf.mxu0
      %v556 = vadd.f32 0.0, %v555
      %v557 = vpop.f32.mrf.mxu0
      %v558 = vadd.f32 0.0, %v557
      %559 = vmatmul.bf16.gmra.mxu0 %v380
      %v560 = vpop.f32.mrf.mxu0
      %v561 = vadd.f32 0.0, %v560
      %v562 = vpop.f32.mrf.mxu0
      %v563 = vadd.f32 0.0, %v562
      %564 = vmatmul.bf16.gmra.mxu0 %v382
      %v565 = vpop.f32.mrf.mxu0
      %v566 = vadd.f32 0.0, %v565
      %v567 = vpop.f32.mrf.mxu0
      %v568 = vadd.f32 0.0, %v567
      %569 = vmatmul.bf16.gmra.mxu0 %v384
      %v570 = vpop.f32.mrf.mxu0
      %v571 = vadd.f32 0.0, %v570
      %v572 = vpop.f32.mrf.mxu0
      %v573 = vadd.f32 0.0, %v572
      %574 = vmatmul.bf16.gmra.mxu0 %v386
      %v575 = vpop.f32.mrf.mxu0
      %v576 = vadd.f32 0.0, %v575
      %v577 = vpop.f32.mrf.mxu0
      %v578 = vadd.f32 0.0, %v577
      %579 = vmatmul.bf16.gmra.mxu0 %v388
      %v580 = vpop.f32.mrf.mxu0
      %v581 = vadd.f32 0.0, %v580
      %v582 = vpop.f32.mrf.mxu0
      %v583 = vadd.f32 0.0, %v582
      %584 = vmatmul.bf16.gmra.mxu0 %v390
      %v585 = vpop.f32.mrf.mxu0
      %v586 = vadd.f32 0.0, %v585
      %v587 = vpop.f32.mrf.mxu0
      %v588 = vadd.f32 0.0, %v587
      %589 = vdwg.mxu0
      %590 = vmatpush.bf16.msra.mxu0 %v524
      %591 = vmatpush.bf16.msra.mxu0 %v523
      %592 = vmatpush.bf16.msra.mxu0 %v522
      %593 = vmatpush.bf16.msra.mxu0 %v521
      %594 = vmatpush.bf16.msra.mxu0 %v520
      %595 = vmatpush.bf16.msra.mxu0 %v519
      %596 = vmatpush.bf16.msra.mxu0 %v518
      %597 = vmatpush.bf16.msra.mxu0 %v517
      %598 = vmatmul.bf16.gmra.mxu0 %v377
      %v599 = vpop.f32.mrf.mxu0
      %v600 = vadd.f32 %v551, %v599
      %v601 = vpop.f32.mrf.mxu0
      %v602 = vadd.f32 %v553, %v601
      %603 = vmatmul.bf16.gmra.mxu0 %v379
      %v604 = vpop.f32.mrf.mxu0
      %v605 = vadd.f32 %v556, %v604
      %v606 = vpop.f32.mrf.mxu0
      %v607 = vadd.f32 %v558, %v606
      %608 = vmatmul.bf16.gmra.mxu0 %v381
      %v609 = vpop.f32.mrf.mxu0
      %v610 = vadd.f32 %v561, %v609
      %v611 = vpop.f32.mrf.mxu0
      %v612 = vadd.f32 %v563, %v611
      %613 = vmatmul.bf16.gmra.mxu0 %v383
      %v614 = vpop.f32.mrf.mxu0
      %v615 = vadd.f32 %v566, %v614
      %v616 = vpop.f32.mrf.mxu0
      %v617 = vadd.f32 %v568, %v616
      %618 = vmatmul.bf16.gmra.mxu0 %v385
      %v619 = vpop.f32.mrf.mxu0
      %v620 = vadd.f32 %v571, %v619
      %v621 = vpop.f32.mrf.mxu0
      %v622 = vadd.f32 %v573, %v621
      %623 = vmatmul.bf16.gmra.mxu0 %v387
      %v624 = vpop.f32.mrf.mxu0
      %v625 = vadd.f32 %v576, %v624
      %v626 = vpop.f32.mrf.mxu0
      %v627 = vadd.f32 %v578, %v626
      %628 = vmatmul.bf16.gmra.mxu0 %v389
      %v629 = vpop.f32.mrf.mxu0
      %v630 = vadd.f32 %v581, %v629
      %v631 = vpop.f32.mrf.mxu0
      %v632 = vadd.f32 %v583, %v631
      %633 = vmatmul.bf16.gmra.mxu0 %v391
      %v634 = vpop.f32.mrf.mxu0
      %v635 = vadd.f32 %v586, %v634
      %v636 = vpop.f32.mrf.mxu0
      %v637 = vadd.f32 %v588, %v636
      %638 = vdwg.mxu0
      %v639 = vadd.f32 %v429, %v600
      %v640 = vadd.f32 %v430, %v602
      %v641 = vadd.f32 %v431, %v605
      %v642 = vadd.f32 %v432, %v607
      %v643 = vadd.f32 %v433, %v610
      %v644 = vadd.f32 %v434, %v612
      %v645 = vadd.f32 %v435, %v615
      %v646 = vadd.f32 %v436, %v617
      %v647 = vadd.f32 %v437, %v620
      %v648 = vadd.f32 %v438, %v622
      %v649 = vadd.f32 %v439, %v625
      %v650 = vadd.f32 %v440, %v627
      %v651 = vadd.f32 %v441, %v630
      %v652 = vadd.f32 %v442, %v632
      %v653 = vadd.f32 %v443, %v635
      %v654 = vadd.f32 %v444, %v637
      %655 = vst [vmem:[#allocation2] sm:$0xff] %v639
      %656 = vst [vmem:[#allocation2 + $0x8] sm:$0xff] %v640
      %657 = vst [vmem:[#allocation2 + $0x10] sm:$0xff] %v641
      %658 = vst [vmem:[#allocation2 + $0x18] sm:$0xff] %v642
      %659 = vst [vmem:[#allocation2 + $0x20] sm:$0xff] %v643
      %660 = vst [vmem:[#allocation2 + $0x28] sm:$0xff] %v644
      %661 = vst [vmem:[#allocation2 + $0x30] sm:$0xff] %v645
      %662 = vst [vmem:[#allocation2 + $0x38] sm:$0xff] %v646
      %663 = vst [vmem:[#allocation2 + $0x40] sm:$0xff] %v647
      %664 = vst [vmem:[#allocation2 + $0x48] sm:$0xff] %v648
      %665 = vst [vmem:[#allocation2 + $0x50] sm:$0xff] %v649
      %666 = vst [vmem:[#allocation2 + $0x58] sm:$0xff] %v650
      %667 = vst [vmem:[#allocation2 + $0x60] sm:$0xff] %v651
      %668 = vst [vmem:[#allocation2 + $0x68] sm:$0xff] %v652
      %669 = vst [vmem:[#allocation2 + $0x70] sm:$0xff] %v653
      %670 = vst [vmem:[#allocation2 + $0x78] sm:$0xff] %v654
      // Predicated region
      $region41: #{lenski_layer.1} parent=35 // pred_check
        %p671 = pneg %p276
      $region42: #{lenski_layer.1} parent=35 // pred_check_branch
        %673 = sbr.rel (%p671) target = $region44
      $region43: #{lenski_layer.1} parent=35 // pred_region
        %v674 = vld [vmem:[#allocation2] sm:$0xff]
        %v675 = vld [vmem:[#allocation2 + $0x8] sm:$0xff]
        %v676 = vld [vmem:[#allocation2 + $0x10] sm:$0xff]
        %v677 = vld [vmem:[#allocation2 + $0x18] sm:$0xff]
        %v678 = vld [vmem:[#allocation2 + $0x20] sm:$0xff]
        %v679 = vld [vmem:[#allocation2 + $0x28] sm:$0xff]
        %v680 = vld [vmem:[#allocation2 + $0x30] sm:$0xff]
        %v681 = vld [vmem:[#allocation2 + $0x38] sm:$0xff]
        %v682 = vld [vmem:[#allocation2 + $0x40] sm:$0xff]
        %v683 = vld [vmem:[#allocation2 + $0x48] sm:$0xff]
        %v684 = vld [vmem:[#allocation2 + $0x50] sm:$0xff]
        %v685 = vld [vmem:[#allocation2 + $0x58] sm:$0xff]
        %v686 = vld [vmem:[#allocation2 + $0x60] sm:$0xff]
        %v687 = vld [vmem:[#allocation2 + $0x68] sm:$0xff]
        %v688 = vld [vmem:[#allocation2 + $0x70] sm:$0xff]
        %v689 = vld [vmem:[#allocation2 + $0x78] sm:$0xff]
        %v690 = vld [vmem:[%s262] sm:$0xff]
        %v691 = vld [vmem:[%s262 + $0x8] sm:$0xff]
        %v692 = vld [vmem:[%s262 + $0x10] sm:$0xff]
        %v693 = vld [vmem:[%s262 + $0x18] sm:$0xff]
        %v694 = vld [vmem:[%s262 + $0x20] sm:$0xff]
        %v695 = vld [vmem:[%s262 + $0x28] sm:$0xff]
        %v696 = vld [vmem:[%s262 + $0x30] sm:$0xff]
        %v697 = vld [vmem:[%s262 + $0x38] sm:$0xff]
        %v698 = vld [vmem:[%s262 + $0x40] sm:$0xff]
        %v699 = vld [vmem:[%s262 + $0x48] sm:$0xff]
        %v700 = vld [vmem:[%s262 + $0x50] sm:$0xff]
        %v701 = vld [vmem:[%s262 + $0x58] sm:$0xff]
        %v702 = vld [vmem:[%s262 + $0x60] sm:$0xff]
        %v703 = vld [vmem:[%s262 + $0x68] sm:$0xff]
        %v704 = vld [vmem:[%s262 + $0x70] sm:$0xff]
        %v705 = vld [vmem:[%s262 + $0x78] sm:$0xff]
        %v706 = vmul.f32 %v674, %v690
        %v707 = vmul.f32 %v675, %v691
        %v708 = vmul.f32 %v676, %v692
        %v709 = vmul.f32 %v677, %v693
        %v710 = vmul.f32 %v678, %v694
        %v711 = vmul.f32 %v679, %v695
        %v712 = vmul.f32 %v680, %v696
        %v713 = vmul.f32 %v681, %v697
        %v714 = vmul.f32 %v682, %v698
        %v715 = vmul.f32 %v683, %v699
        %v716 = vmul.f32 %v684, %v700
        %v717 = vmul.f32 %v685, %v701
        %v718 = vmul.f32 %v686, %v702
        %v719 = vmul.f32 %v687, %v703
        %v720 = vmul.f32 %v688, %v704
        %v721 = vmul.f32 %v689, %v705
        %v722 = vld [vmem:[%s268] sm:$0xff]
        %v723 = vld [vmem:[%s268 + $0x8] sm:$0xff]
        %v724 = vld [vmem:[%s268 + $0x10] sm:$0xff]
        %v725 = vld [vmem:[%s268 + $0x18] sm:$0xff]
        %v726 = vld [vmem:[%s268 + $0x20] sm:$0xff]
        %v727 = vld [vmem:[%s268 + $0x28] sm:$0xff]
        %v728 = vld [vmem:[%s268 + $0x30] sm:$0xff]
        %v729 = vld [vmem:[%s268 + $0x38] sm:$0xff]
        %v730 = vld [vmem:[%s268 + $0x40] sm:$0xff]
        %v731 = vld [vmem:[%s268 + $0x48] sm:$0xff]
        %v732 = vld [vmem:[%s268 + $0x50] sm:$0xff]
        %v733 = vld [vmem:[%s268 + $0x58] sm:$0xff]
        %v734 = vld [vmem:[%s268 + $0x60] sm:$0xff]
        %v735 = vld [vmem:[%s268 + $0x68] sm:$0xff]
        %v736 = vld [vmem:[%s268 + $0x70] sm:$0xff]
        %v737 = vld [vmem:[%s268 + $0x78] sm:$0xff]
        %v738 = vadd.f32 %v706, %v722
        %v739 = vadd.f32 %v707, %v723
        %v740 = vadd.f32 %v708, %v724
        %v741 = vadd.f32 %v709, %v725
        %v742 = vadd.f32 %v710, %v726
        %v743 = vadd.f32 %v711, %v727
        %v744 = vadd.f32 %v712, %v728
        %v745 = vadd.f32 %v713, %v729
        %v746 = vadd.f32 %v714, %v730
        %v747 = vadd.f32 %v715, %v731
        %v748 = vadd.f32 %v716, %v732
        %v749 = vadd.f32 %v717, %v733
        %v750 = vadd.f32 %v718, %v734
        %v751 = vadd.f32 %v719, %v735
        %v752 = vadd.f32 %v720, %v736
        %v753 = vadd.f32 %v721, %v737
        %754 = vst [vmem:[%s274] sm:$0xff] %v738
        %755 = vst [vmem:[%s274 + $0x8] sm:$0xff] %v739
        %756 = vst [vmem:[%s274 + $0x10] sm:$0xff] %v740
        %757 = vst [vmem:[%s274 + $0x18] sm:$0xff] %v741
        %758 = vst [vmem:[%s274 + $0x20] sm:$0xff] %v742
        %759 = vst [vmem:[%s274 + $0x28] sm:$0xff] %v743
        %760 = vst [vmem:[%s274 + $0x30] sm:$0xff] %v744
        %761 = vst [vmem:[%s274 + $0x38] sm:$0xff] %v745
        %762 = vst [vmem:[%s274 + $0x40] sm:$0xff] %v746
        %763 = vst [vmem:[%s274 + $0x48] sm:$0xff] %v747
        %764 = vst [vmem:[%s274 + $0x50] sm:$0xff] %v748
        %765 = vst [vmem:[%s274 + $0x58] sm:$0xff] %v749
        %766 = vst [vmem:[%s274 + $0x60] sm:$0xff] %v750
        %767 = vst [vmem:[%s274 + $0x68] sm:$0xff] %v751
        %768 = vst [vmem:[%s274 + $0x70] sm:$0xff] %v752
        %769 = vst [vmem:[%s274 + $0x78] sm:$0xff] %v753
      $region44: #{lenski_layer.1} parent=35 // pred_fallthru
        _
      %s770 = smul.u32 16, %s19
      %p771 = scmp.lt.s32.totalorder %s770, 31
      %s772 = scalar_select %p771, %s770, 31
      %s773 = smul.addr %s772, 8
      %s774 = scalar_lea.vmem %s4, %s773
      // Predicated region
      $region45: #{lenski_layer.1} parent=35 // pred_check
        %p775 = pneg %p146
      $region46: #{lenski_layer.1} parent=35 // pred_check_branch
        %777 = sbr.rel (%p775) target = $region48
      $region47: #{lenski_layer.1} parent=35 // pred_region
        %s778 = smul.u32 16, %s19
      $region48: #{lenski_layer.1} parent=35 // pred_fallthru
        _
    $region36: #{lenski_layer.1} parent=5 // pred_fallthru
      _
    %p779 = scmp.le.s32.totalorder 2, %s10
    // Predicated region
    $region49: #{lenski_layer.1} parent=5 // pred_check
      %p780 = pneg %p779
    $region50: #{lenski_layer.1} parent=5 // pred_check_branch
      %782 = sbr.rel (%p780) target = $region52
    $region51: #{lenski_layer.1} parent=5 // pred_region
      %s783 = ssub.s32 %s10, 2
      // Predicated region
      $region53: #{lenski_layer.1} parent=51 // pred_check
        %p784 = pneg %p152
      $region54: #{lenski_layer.1} parent=51 // pred_check_branch
        %786 = sbr.rel (%p784) target = $region56
      $region55: #{lenski_layer.1} parent=51 // pred_region
        %s787 = smul.u32 16, %s21
        %p788 = scmp.lt.s32.totalorder %s787, 31
        %s789 = scalar_select %p788, %s787, 31
        %s790 = smul.addr %s789, 8
        %s791 = scalar_lea.vmem %s4, %s790
      $region56: #{lenski_layer.1} parent=51 // pred_fallthru
        _
    $region52: #{lenski_layer.1} parent=5 // pred_fallthru
      _
  $region6: #{lenski_layer.1} parent=0 // loop_footer
    %s14 = sadd.s32 1, %s10
  $region7: #{lenski_layer.1} parent=0 // loop_footer_branch
    %9 = sbr.rel target = $region3
  $region8: #{lenski_layer.1} parent=0 // loop_exit
    _

</llo_original>
